<compile_context>
chip_gen: v7x
topology: tpu7x:2x2x1
jax: 0.10.0
libtpu: 0.0.40
codegen_flags: <defaults>
</compile_context>

<pallas_src>
import functools

import jax
import jax.numpy as jnp
import numpy as np
from jax.experimental import pallas as pl
from jax.experimental.pallas import tpu as pltpu


# ----------------------------------------------------------------------------
# Tile selection / VMEM budgeting helpers
# ----------------------------------------------------------------------------
def _pick_doc_tile(num_docs, num_doc_tokens, row_target):
    """Docs per tile: divides N, rows multiple of 8 (sublane), rows <= target."""
    cap = min(num_docs, max(1, row_target // max(num_doc_tokens, 1)))
    for d in range(cap, 0, -1):
        if num_docs % d == 0 and (d * num_doc_tokens) % 8 == 0:
            return d
    return num_docs          # full extent is always a legal block


def _pick_m_tile(m, target):
    """Rows per tile for pass 2: divides M, multiple of 8, <= target."""
    for d in range(min(m, target), 0, -1):
        if m % d == 0 and d % 8 == 0:
            return d
    return m                 # full extent is always a legal block


def _round_up(x, k):
    return ((x + k - 1) // k) * k


def _vmem_limit(est_bytes):
    """Explicit scoped-VMEM budget: 2x headroom, floor 32 MiB, v7x-safe cap."""
    return int(max(32 * 1024 * 1024, min(2 * est_bytes, 56 * 1024 * 1024)))


# ----------------------------------------------------------------------------
# Pass 1: aggdoc = sum over doc-token rows of (doc-axis masked softmax)^T @ doc
# ----------------------------------------------------------------------------
def _aggdoc_kernel(doc_ref, q_ref, dmask_ref, aggdoc_ref, acc_ref, *,
                   docs_per_tile, num_doc_tokens):
    nt = pl.program_id(1)

    @pl.when(nt == 0)
    def _():
        acc_ref[...] = jnp.zeros_like(acc_ref)

    doc = doc_ref[0]                              # (R, H)  native dtype (MXU)
    q = q_ref[0]                                  # (U, H)  native dtype (MXU)
    dmask = dmask_ref[0]                          # (R, 1)  f32
    R = doc.shape[0]
    U = q.shape[0]
    D, T = docs_per_tile, num_doc_tokens

    # Raw attention scores for this tile of documents.          (R, U)  [MXU]
    s = jax.lax.dot_general(doc, q, (((1,), (1,)), ((), ())),
                            preferred_element_type=jnp.float32)

    # allennlp masked_softmax over the doc-token axis T of each document.
    # Sublane regrouping (R,U) -> (D,T,U); reductions over T; lanes untouched.
    sm = (s * dmask).reshape(D, T, U)
    m3 = dmask.reshape(D, T, 1)
    sm = sm - jnp.max(sm, axis=1, keepdims=True)
    e = jnp.exp(sm)
    # 1/Z on the EUP; the approximation cancels in the renormalization below.
    p = e * pl.reciprocal(jnp.sum(e, axis=1, keepdims=True), approx=True)
    p = p * m3
    p = p * pl.reciprocal(jnp.sum(p, axis=1, keepdims=True) + 1e-13, approx=False)
    attn_t = p.reshape(R, U).astype(doc.dtype)    # back to the MXU input dtype

    # Partial aggdoc: single contraction over the R rows of this tile.  (U, H)
    acc_ref[...] += jax.lax.dot_general(attn_t, doc, (((0,), (0,)), ((), ())),
                                        preferred_element_type=jnp.float32)

    @pl.when(nt == pl.num_programs(1) - 1)
    def _():
        aggdoc_ref[0] = acc_ref[...].astype(aggdoc_ref.dtype)


# ----------------------------------------------------------------------------
# Pass 2: per M-tile q-axis masked softmax; out = attn @ [q | aggdoc]  (tm, 2H)
# ----------------------------------------------------------------------------
def _joint_out_kernel(doc_ref, q_ref, qmask_ref, qcat_ref, out_ref):
    doc = doc_ref[0]                              # (Tm, H)  native dtype (MXU)
    q = q_ref[0]                                  # (U, H)   native dtype (MXU)
    qmask = qmask_ref[0]                          # (1, U)   f32
    qcat = qcat_ref[0]                            # (U, 2H)  = [q | aggdoc]

    s = jax.lax.dot_general(doc, q, (((1,), (1,)), ((), ())),
                            preferred_element_type=jnp.float32)     # (Tm, U)

    sm = s * qmask
    sm = sm - jnp.max(sm, axis=-1, keepdims=True)
    e = jnp.exp(sm)
    p = e * pl.reciprocal(jnp.sum(e, axis=-1, keepdims=True), approx=True)
    p = p * qmask
    attn = (p * pl.reciprocal(jnp.sum(p, axis=-1, keepdims=True) + 1e-13,
                              approx=False)).astype(qcat.dtype)

    # Single MXU matmul produces the concatenated [aggq | aggq2] directly.
    out_ref[0] = jnp.dot(attn, qcat,
                         preferred_element_type=jnp.float32).astype(out_ref.dtype)


# ----------------------------------------------------------------------------
# Wrapper
# ----------------------------------------------------------------------------
def joint_encoder(doc_encoding, q_encoding, doc_mask, q_mask, *, row_target=512):
    """doc_encoding (B,N,T,H), q_encoding (B,U,H), doc_mask (B,N,T), q_mask (B,U)
       -> (B, N*T, 2H) (matches the torch cat([aggq, aggq2], -1))."""
    B, N, T, H = doc_encoding.shape
    U = q_encoding.shape[1]
    M = N * T

    dtype = doc_encoding.dtype
    doc_flat = doc_encoding.reshape(B, M, H)
    q_encoding = q_encoding.astype(dtype)
    # Masks are kept in f32: all softmax/VPU math stays f32 on every generation.
    # NOTE: the trailing dim of 1 pads to 128 lanes in VMEM; with <= row_target
    # rows per tile that is < 1 MiB.
    dmask = doc_mask.reshape(B, M, 1).astype(jnp.float32)
    qmask = q_mask.reshape(B, 1, U).astype(jnp.float32)

    dn = _pick_doc_tile(N, T, row_target)
    rows = dn * T
    n_tiles = N // dn
    tm = _pick_m_tile(M, row_target)
    m_tiles = M // tm

    isz = doc_flat.dtype.itemsize
    u_pad = _round_up(U, 128)
    f32 = 4

    # ----- pass 1: aggdoc (B, U, H) ------------------------------------------
    est1 = (2 * rows * H * isz          # doc tile (double buffered)
            + 2 * U * H * isz           # q
            + 2 * rows * 128 * f32      # doc mask (lane padded)
            + 2 * U * H * isz           # output
            + U * H * f32               # f32 accumulator scratch
            + 5 * rows * u_pad * f32)   # s / exp / p intermediates
    aggdoc = pl.pallas_call(
        functools.partial(_aggdoc_kernel, docs_per_tile=dn, num_doc_tokens=T),
        out_shape=jax.ShapeDtypeStruct((B, U, H), dtype),
        grid_spec=pltpu.PrefetchScalarGridSpec(
            num_scalar_prefetch=0,
            grid=(B, n_tiles),
            in_specs=[
                pl.BlockSpec((1, rows, H), lambda b, n: (b, n, 0)),   # doc tile
                pl.BlockSpec((1, U, H), lambda b, n: (b, 0, 0)),      # q
                pl.BlockSpec((1, rows, 1), lambda b, n: (b, n, 0)),   # doc mask
            ],
            out_specs=pl.BlockSpec((1, U, H), lambda b, n: (b, 0, 0)),
            scratch_shapes=[pltpu.VMEM((U, H), jnp.float32)],
        ),
        compiler_params=pltpu.CompilerParams(
            dimension_semantics=("parallel", "arbitrary"),
            vmem_limit_bytes=_vmem_limit(est1)),
    )(doc_flat, q_encoding, dmask)

    # [q | aggdoc]: tiny (B, U, 2H) concat in XLA; lets pass 2 emit the final
    # concatenated output with a single, 2H-lane-wide MXU matmul per tile.
    qcat = jnp.concatenate([q_encoding, aggdoc], axis=-1)

    # ----- pass 2: out = attn @ [q | aggdoc], tiled over M --------------------
    est2 = (2 * tm * H * isz            # doc tile
            + 2 * U * H * isz           # q
            + 2 * 8 * u_pad * f32       # q mask (sublane/lane padded)
            + 2 * U * 2 * H * isz       # qcat
            + 2 * tm * 2 * H * isz      # output
            + 5 * tm * u_pad * f32      # s / exp / attn intermediates
            + tm * 2 * H * f32)         # f32 matmul result before cast
    out = pl.pallas_call(
        _joint_out_kernel,
        out_shape=jax.ShapeDtypeStruct((B, M, 2 * H), dtype),
        grid_spec=pltpu.PrefetchScalarGridSpec(
            num_scalar_prefetch=0,
            grid=(B, m_tiles),
            in_specs=[
                pl.BlockSpec((1, tm, H), lambda b, m: (b, m, 0)),     # doc tile
                pl.BlockSpec((1, U, H), lambda b, m: (b, 0, 0)),      # q
                pl.BlockSpec((1, 1, U), lambda b, m: (b, 0, 0)),      # q mask
                pl.BlockSpec((1, U, 2 * H), lambda b, m: (b, 0, 0)),  # [q|aggdoc]
            ],
            out_specs=pl.BlockSpec((1, tm, 2 * H), lambda b, m: (b, m, 0)),
        ),
        compiler_params=pltpu.CompilerParams(
            dimension_semantics=("parallel", "parallel"),
            vmem_limit_bytes=_vmem_limit(est2)),
    )(doc_flat, q_encoding, qmask, qcat)

    return out


# ----------------------------------------------------------------------------
# Pure-JAX reference mirroring the PyTorch forward exactly
# ----------------------------------------------------------------------------
def joint_encoder_ref(doc_encoding, q_encoding, doc_mask, q_mask):
    B, N, T, H = doc_encoding.shape
    U = q_encoding.shape[1]
    M = N * T
    doc = doc_encoding.reshape(B, M, H)
    s = jnp.einsum('bmh,buh->bmu', doc, q_encoding)
    qm = q_mask.reshape(B, 1, U).astype(s.dtype)
    sm = s * qm
    sm = sm - jnp.max(sm, axis=-1, keepdims=True)
    e = jnp.exp(sm)
    p = e / jnp.sum(e, axis=-1, keepdims=True)
    p = p * qm
    attn = p / (jnp.sum(p, axis=-1, keepdims=True) + 1e-13)
    aggq = jnp.einsum('bmu,buh->bmh', attn, q_encoding)
    st = s.reshape(B, N, T, U)
    dm = doc_mask.reshape(B, N, T, 1).astype(s.dtype)
    smt = st * dm
    smt = smt - jnp.max(smt, axis=2, keepdims=True)
    et = jnp.exp(smt)
    pt = et / jnp.sum(et, axis=2, keepdims=True)
    pt = pt * dm
    attn_t = pt / (jnp.sum(pt, axis=2, keepdims=True) + 1e-13)
    aggdoc = jnp.einsum('bntu,bnth->buh', attn_t, doc_encoding)
    aggq2 = jnp.einsum('bmu,buh->bmh', attn, aggdoc)
    return jnp.concatenate([aggq, aggq2], axis=-1)


if __name__ == "__main__":
    B, N, T, U, H = 2, 2, 8, 8, 32

    key = jax.random.PRNGKey(0)
    k1, k2 = jax.random.split(key)
    doc_encoding = jax.random.normal(k1, (B, N, T, H), dtype=jnp.float32)
    q_encoding = jax.random.normal(k2, (B, U, H), dtype=jnp.float32)

    # deterministic masks with some padding positions zeroed out
    doc_mask = jnp.ones((B, N, T), dtype=jnp.float32)
    doc_mask = doc_mask.at[:, :, T - 2:].set(0.0)   # last 2 doc tokens padded
    q_mask = jnp.ones((B, U), dtype=jnp.float32)
    q_mask = q_mask.at[:, U - 3:].set(0.0)          # last 3 query tokens padded

    out = joint_encoder(doc_encoding, q_encoding, doc_mask, q_mask)
    out = jax.block_until_ready(out)

    ref = joint_encoder_ref(doc_encoding, q_encoding, doc_mask, q_mask)
    np.testing.assert_allclose(np.asarray(out), np.asarray(ref),
                               rtol=1e-5, atol=1e-5)

    assert out.shape == (B, N * T, 2 * H)
    print("KERNEL_OK")
</pallas_src>

<mosaic_0001>
module attributes {stable_mosaic.version = 11 : i64} {
  func.func @_aggdoc_kernel(%arg0: i32, %arg1: i32, %arg2: memref<1x16x32xf32, #tpu.memory_space<vmem>>, %arg3: memref<1x8x32xf32, #tpu.memory_space<vmem>>, %arg4: memref<1x16x1xf32, #tpu.memory_space<vmem>>, %arg5: memref<1x8x32xf32, #tpu.memory_space<vmem>>, %arg6: memref<8x32xf32, #tpu.memory_space<vmem>>) attributes {dimension_semantics = [#tpu.dimension_semantics<parallel>, #tpu.dimension_semantics<arbitrary>], iteration_bounds = array<i64: 2, 1>, scalar_prefetch = 0 : i64, scratch_operands = 1 : i64, tpu.core_type = #tpu.core_type<tc>, window_params = [{transform_indices = @transform_0, window_bounds = array<i64: 1, 16, 32>}, {transform_indices = @transform_1, window_bounds = array<i64: 1, 8, 32>}, {transform_indices = @transform_2, window_bounds = array<i64: 1, 16, 1>}, {transform_indices = @transform_3, window_bounds = array<i64: 1, 8, 32>}]} {
    %c0_i32 = arith.constant 0 : i32
    %0 = arith.cmpi eq, %arg1, %c0_i32 : i32
    %1 = arith.extui %0 : i1 to i32
    %c0_i32_0 = arith.constant 0 : i32
    %2 = arith.cmpi ne, %1, %c0_i32_0 : i32
    scf.if %2 {
      %cst_20 = arith.constant 0.000000e+00 : f32
      %41 = vector.broadcast %cst_20 : f32 to vector<8x32xf32>
      %c0_21 = arith.constant 0 : index
      %c0_22 = arith.constant 0 : index
      %42 = vector.load %arg6[%c0_21, %c0_22] : memref<8x32xf32, #tpu.memory_space<vmem>>, vector<8x32xf32>
      tpu.vector_store %arg6[%c0_21, %c0_22], %41 {strides = array<i32>} : memref<8x32xf32, #tpu.memory_space<vmem>>, vector<8x32xf32>,
    } else {
    }
    %c0 = arith.constant 0 : index
    %c0_1 = arith.constant 0 : index
    %c0_2 = arith.constant 0 : index
    %3 = vector.load %arg2[%c0, %c0_1, %c0_2] : memref<1x16x32xf32, #tpu.memory_space<vmem>>, vector<1x16x32xf32>
    %4 = vector.shape_cast %3 : vector<1x16x32xf32> to vector<16x32xf32>
    %c0_3 = arith.constant 0 : index
    %c0_4 = arith.constant 0 : index
    %c0_5 = arith.constant 0 : index
    %5 = vector.load %arg3[%c0_3, %c0_4, %c0_5] : memref<1x8x32xf32, #tpu.memory_space<vmem>>, vector<1x8x32xf32>
    %6 = vector.shape_cast %5 : vector<1x8x32xf32> to vector<8x32xf32>
    %c0_6 = arith.constant 0 : index
    %c0_7 = arith.constant 0 : index
    %c0_8 = arith.constant 0 : index
    %7 = vector.load %arg4[%c0_6, %c0_7, %c0_8] : memref<1x16x1xf32, #tpu.memory_space<vmem>>, vector<1x16x1xf32>
    %8 = vector.shape_cast %7 : vector<1x16x1xf32> to vector<16x1xf32>
    %cst = arith.constant dense<0.000000e+00> : vector<16x8xf32>
    %9 = tpu.matmul %4, %6, %cst {dimension_numbers = #tpu.dot_dimension_numbers<[1], [1], [0], [0], [0, 0, 1, 0], [], []>} : vector<16x32xf32>, vector<8x32xf32>, vector<16x8xf32> -> vector<16x8xf32>
    %10 = vector.broadcast %8 : vector<16x1xf32> to vector<16x8xf32>
    %11 = arith.mulf %9, %10 : vector<16x8xf32>
    %12 = vector.shape_cast %11 : vector<16x8xf32> to vector<2x8x8xf32>
    %13 = vector.shape_cast %8 : vector<16x1xf32> to vector<2x8x1xf32>
    %cst_9 = arith.constant dense<0xFF800000> : vector<2x8xf32>
    %14 = vector.multi_reduction <maximumf>, %12, %cst_9 [1] : vector<2x8x8xf32> to vector<2x8xf32>
    %15 = vector.shape_cast %14 : vector<2x8xf32> to vector<2x1x8xf32>
    %16 = vector.broadcast %15 : vector<2x1x8xf32> to vector<2x8x8xf32>
    %17 = arith.subf %12, %16 : vector<2x8x8xf32>
    %18 = math.exp %17 : vector<2x8x8xf32>
    %cst_10 = arith.constant dense<0.000000e+00> : vector<2x8xf32>
    %19 = vector.multi_reduction <add>, %18, %cst_10 [1] : vector<2x8x8xf32> to vector<2x8xf32>
    %20 = vector.shape_cast %19 : vector<2x8xf32> to vector<2x1x8xf32>
    %21 = tpu.reciprocal %20 {approx = true} : vector<2x1x8xf32> -> vector<2x1x8xf32>
    %22 = vector.broadcast %21 : vector<2x1x8xf32> to vector<2x8x8xf32>
    %23 = arith.mulf %18, %22 : vector<2x8x8xf32>
    %24 = vector.broadcast %13 : vector<2x8x1xf32> to vector<2x8x8xf32>
    %25 = arith.mulf %23, %24 : vector<2x8x8xf32>
    %cst_11 = arith.constant dense<0.000000e+00> : vector<2x8xf32>
    %26 = vector.multi_reduction <add>, %25, %cst_11 [1] : vector<2x8x8xf32> to vector<2x8xf32>
    %27 = vector.shape_cast %26 : vector<2x8xf32> to vector<2x1x8xf32>
    %cst_12 = arith.constant 9.99999982E-14 : f32
    %28 = vector.broadcast %cst_12 : f32 to vector<2x1x8xf32>
    %29 = arith.addf %27, %28 : vector<2x1x8xf32>
    %30 = tpu.reciprocal %29 : vector<2x1x8xf32> -> vector<2x1x8xf32>
    %31 = vector.broadcast %30 : vector<2x1x8xf32> to vector<2x8x8xf32>
    %32 = arith.mulf %25, %31 : vector<2x8x8xf32>
    %33 = vector.shape_cast %32 : vector<2x8x8xf32> to vector<16x8xf32>
    %c0_13 = arith.constant 0 : index
    %c0_14 = arith.constant 0 : index
    %34 = vector.load %arg6[%c0_13, %c0_14] : memref<8x32xf32, #tpu.memory_space<vmem>>, vector<8x32xf32>
    %cst_15 = arith.constant dense<0.000000e+00> : vector<8x32xf32>
    %35 = tpu.matmul %33, %4, %cst_15 {dimension_numbers = #tpu.dot_dimension_numbers<[0], [0], [1], [1], [0, 1, 1, 1], [], []>} : vector<16x8xf32>, vector<16x32xf32>, vector<8x32xf32> -> vector<8x32xf32>
    %36 = arith.addf %34, %35 : vector<8x32xf32>
    %c0_16 = arith.constant 0 : index
    %c0_17 = arith.constant 0 : index
    %37 = vector.load %arg6[%c0_16, %c0_17] : memref<8x32xf32, #tpu.memory_space<vmem>>, vector<8x32xf32>
    tpu.vector_store %arg6[%c0_16, %c0_17], %36 {strides = array<i32>} : memref<8x32xf32, #tpu.memory_space<vmem>>, vector<8x32xf32>,
    %c0_i32_18 = arith.constant 0 : i32
    %38 = arith.cmpi eq, %arg1, %c0_i32_18 : i32
    %39 = arith.extui %38 : i1 to i32
    %c0_i32_19 = arith.constant 0 : i32
    %40 = arith.cmpi ne, %39, %c0_i32_19 : i32
    scf.if %40 {
      %c0_20 = arith.constant 0 : index
      %c0_21 = arith.constant 0 : index
      %41 = vector.load %arg6[%c0_20, %c0_21] : memref<8x32xf32, #tpu.memory_space<vmem>>, vector<8x32xf32>
      %c0_22 = arith.constant 0 : index
      %c0_23 = arith.constant 0 : index
      %c0_24 = arith.constant 0 : index
      %42 = vector.load %arg5[%c0_22, %c0_23, %c0_24] : memref<1x8x32xf32, #tpu.memory_space<vmem>>, vector<1x8x32xf32>
      %43 = vector.shape_cast %42 : vector<1x8x32xf32> to vector<8x32xf32>
      %44 = vector.shape_cast %41 : vector<8x32xf32> to vector<1x8x32xf32>
      tpu.vector_store %arg5[%c0_22, %c0_23, %c0_24], %44 {strides = array<i32>} : memref<1x8x32xf32, #tpu.memory_space<vmem>>, vector<1x8x32xf32>,
    } else {
    }
    return
  }
  func.func @transform_0(%arg0: i32, %arg1: i32) -> (i32, i32, i32) {
    %c0_i32 = arith.constant 0 : i32
    %c0_i32_0 = arith.constant 0 : i32
    return %arg0, %arg1, %c0_i32 : i32, i32, i32
  }
  func.func @transform_1(%arg0: i32, %arg1: i32) -> (i32, i32, i32) {
    %c0_i32 = arith.constant 0 : i32
    %c0_i32_0 = arith.constant 0 : i32
    %c0_i32_1 = arith.constant 0 : i32
    return %arg0, %c0_i32, %c0_i32_0 : i32, i32, i32
  }
  func.func @transform_2(%arg0: i32, %arg1: i32) -> (i32, i32, i32) {
    %c0_i32 = arith.constant 0 : i32
    %c0_i32_0 = arith.constant 0 : i32
    return %arg0, %arg1, %c0_i32 : i32, i32, i32
  }
  func.func @transform_3(%arg0: i32, %arg1: i32) -> (i32, i32, i32) {
    %c0_i32 = arith.constant 0 : i32
    %c0_i32_0 = arith.constant 0 : i32
    %c0_i32_1 = arith.constant 0 : i32
    return %arg0, %c0_i32, %c0_i32_0 : i32, i32, i32
  }
}

</mosaic_0001>

<llo_original>
// kernel: tpu_custom_call.1
$region0: #{tpu_custom_call.1}
  #allocation0 [shape = 'u32[]', space=smem, size = 0x4, offset = 0x4, fixed_abs, tag = 'smem constant byte address 0x4 - core index']
  #allocation1 [shape = 'u32[144,128]{1,0:T(1,128)}', space=vmem, size = 0x12000, scoped, tag = 'internal scratch']
  #allocation2 [shape = 'f32[8,32]{1,0:T(8,128)}', space=vmem, size = 0x1000, scoped, tag = 'scratch operand']
  %s0 = inlined_call_operand.vmem [shape: f32[2,16,32], index: 0, kind: input, shape index: {}]
  %s1 = inlined_call_operand.hbm [shape: f32[2,8,32], index: 1, kind: input, shape index: {}]
  %s2 = inlined_call_operand.vmem [shape: f32[2,16,1], index: 2, kind: input, shape index: {}]
  %s3 = inlined_call_operand.hbm [shape: f32[2,8,32], index: 3, kind: output, shape index: {}]
  %s4 = sld [smem:[#allocation0]]
  $region57: #{tpu_custom_call.1} parent=0
    _
  %s6 = ssub.s32 1, %s4
  %s7 = scalar_select 0, %s6, %s4
  $region1: #{tpu_custom_call.1} parent=0
    #allocation3 [shape = 'u8[8192]{0}', space=vmem, size = 0x2000, scoped, tag = 'input window, operand 1']
    #allocation4 [shape = 's32[2]{0}', space=sflag, size = 0x8, scoped, tag = 'scoped memory for tpu_custom_call.1']
    #allocation5 [shape = 's32[2]{0}', space=sflag, size = 0x8, scoped, tag = 'scoped memory for tpu_custom_call.1']
    #allocation6 [shape = 'u8[8192]{0}', space=vmem, size = 0x2000, scoped, tag = 'output window, operand 0']
    %8 = vsyncpa [#allocation4], 0
    %s9 = scalar_lea.sflag [#allocation4], 1
    %10 = vsyncpa %s9, 0
    %11 = vsyncpa [#allocation5], 0
    %s12 = scalar_lea.sflag [#allocation5], 1
    %13 = vsyncpa %s12, 0
    loop: start=0, step=1, limit=4
    $region2: #{tpu_custom_call.1} parent=1 // loop_pre_header
      _
    $region3: #{tpu_custom_call.1} parent=1 // loop_header
      %s15 = sphi 0, %s19
      %p16 = scmp.ge.s32.totalorder %s15, 4
      %s22 = sphi 0, %s34
      %s23 = sphi 0, %s30
      %s24 = sphi 0, %s22
      %s25 = sphi 0, %s23
      %s26 = sphi 0, %s24
      %s27 = sphi 0, %s25
      %s39 = sphi 0, %s41
      %s42 = sphi 0, %s39
      %s43 = sphi 0, %s42
      %s59 = sphi 0, %s43
      %s65 = sphi 0, %s67
      %s68 = sphi 0, %s65
      %s69 = sphi 0, %s68
      %s85 = sphi 0, %s69
      %s93 = sphi 0, %s95
      %s96 = sphi 0, %s93
      %s97 = sphi 0, %s96
      %s113 = sphi 0, %s97
      %s119 = sphi 0, %s121
      %s122 = sphi 0, %s119
      %s123 = sphi 0, %s122
      %s139 = sphi 0, %s123
    $region4: #{tpu_custom_call.1} parent=1 // loop_header_branch
      %18 = sbr.rel (%p16) target = $region8
    $region5: #{tpu_custom_call.1} parent=1 // loop_body
      %s20 = ssub.s32 %s15, 1
      %s21 = ssub.s32 %s15, 2
      %s28 = sadd.s32 1, %s23
      %p29 = scmp.ge.s32.totalorder %s28, 1
      %s30 = scalar_select %p29, 0, %s28
      %s31 = sadd.s32 1, %s22
      %s32 = scalar_select %p29, %s31, %s22
      %p33 = scmp.ge.s32.totalorder %s32, 2
      %s34 = scalar_select %p33, 0, %s32
      %s35 = ssub.s32 %s22, %s34
      %s36 = ssub.s32 %s23, %s30
      %s37 = sor.u32 %s35, %s36
      %p38 = scmp.eq.s32.totalorder %s37, 0
      %s40 = sadd.s32 %s39, 1
      %s41 = scalar_select %p38, %s39, %s40
      %p44 = pneg %p38
      %p45 = scmp.eq.s32.totalorder %s15, 1
      %p46 = por %p44, %p45
      %p47 = scmp.ne.s32.totalorder %s39, %s42
      %p48 = scmp.eq.s32.totalorder %s15, 0
      %p49 = por %p47, %p48
      %p50 = scmp.ne.s32.totalorder %s39, %s42
      %p51 = scmp.eq.s32.totalorder %s20, 1
      %p52 = por %p50, %p51
      %p53 = scmp.ne.s32.totalorder %s42, %s43
      %p54 = scmp.eq.s32.totalorder %s20, 0
      %p55 = por %p53, %p54
      %p56 = scmp.ne.s32.totalorder %s42, %s43
      %p57 = scmp.eq.s32.totalorder %s21, 1
      %p58 = por %p56, %p57
      %p60 = scmp.ne.s32.totalorder %s43, %s59
      %p61 = scmp.eq.s32.totalorder %s21, 0
      %p62 = por %p60, %p61
      %s63 = ssub.s32 %s22, %s34
      %p64 = scmp.eq.s32.totalorder %s63, 0
      %s66 = sadd.s32 %s65, 1
      %s67 = scalar_select %p64, %s65, %s66
      %p70 = pneg %p64
      %p71 = scmp.eq.s32.totalorder %s15, 1
      %p72 = por %p70, %p71
      %p73 = scmp.ne.s32.totalorder %s65, %s68
      %p74 = scmp.eq.s32.totalorder %s15, 0
      %p75 = por %p73, %p74
      %p76 = scmp.ne.s32.totalorder %s65, %s68
      %p77 = scmp.eq.s32.totalorder %s20, 1
      %p78 = por %p76, %p77
      %p79 = scmp.ne.s32.totalorder %s68, %s69
      %p80 = scmp.eq.s32.totalorder %s20, 0
      %p81 = por %p79, %p80
      %p82 = scmp.ne.s32.totalorder %s68, %s69
      %p83 = scmp.eq.s32.totalorder %s21, 1
      %p84 = por %p82, %p83
      %p86 = scmp.ne.s32.totalorder %s69, %s85
      %p87 = scmp.eq.s32.totalorder %s21, 0
      %p88 = por %p86, %p87
      %s89 = ssub.s32 %s22, %s34
      %s90 = ssub.s32 %s23, %s30
      %s91 = sor.u32 %s89, %s90
      %p92 = scmp.eq.s32.totalorder %s91, 0
      %s94 = sadd.s32 %s93, 1
      %s95 = scalar_select %p92, %s93, %s94
      %p98 = pneg %p92
      %p99 = scmp.eq.s32.totalorder %s15, 1
      %p100 = por %p98, %p99
      %p101 = scmp.ne.s32.totalorder %s93, %s96
      %p102 = scmp.eq.s32.totalorder %s15, 0
      %p103 = por %p101, %p102
      %p104 = scmp.ne.s32.totalorder %s93, %s96
      %p105 = scmp.eq.s32.totalorder %s20, 1
      %p106 = por %p104, %p105
      %p107 = scmp.ne.s32.totalorder %s96, %s97
      %p108 = scmp.eq.s32.totalorder %s20, 0
      %p109 = por %p107, %p108
      %p110 = scmp.ne.s32.totalorder %s96, %s97
      %p111 = scmp.eq.s32.totalorder %s21, 1
      %p112 = por %p110, %p111
      %p114 = scmp.ne.s32.totalorder %s97, %s113
      %p115 = scmp.eq.s32.totalorder %s21, 0
      %p116 = por %p114, %p115
      %s117 = ssub.s32 %s22, %s34
      %p118 = scmp.eq.s32.totalorder %s117, 0
      %s120 = sadd.s32 %s119, 1
      %s121 = scalar_select %p118, %s119, %s120
      %p124 = pneg %p118
      %p125 = scmp.eq.s32.totalorder %s15, 1
      %p126 = por %p124, %p125
      %p127 = scmp.ne.s32.totalorder %s119, %s122
      %p128 = scmp.eq.s32.totalorder %s15, 0
      %p129 = por %p127, %p128
      %p130 = scmp.ne.s32.totalorder %s119, %s122
      %p131 = scmp.eq.s32.totalorder %s20, 1
      %p132 = por %p130, %p131
      %p133 = scmp.ne.s32.totalorder %s122, %s123
      %p134 = scmp.eq.s32.totalorder %s20, 0
      %p135 = por %p133, %p134
      %p136 = scmp.ne.s32.totalorder %s122, %s123
      %p137 = scmp.eq.s32.totalorder %s21, 1
      %p138 = por %p136, %p137
      %p140 = scmp.ne.s32.totalorder %s123, %s139
      %p141 = scmp.eq.s32.totalorder %s21, 0
      %p142 = por %p140, %p141
      %p143 = scmp.le.s32.totalorder 1, %s15
      %p144 = scmp.lt.s32.totalorder %s15, 3
      %p145 = pnand %p143, %p144
      %p146 = pneg %p145
      // Predicated region
      $region9: #{tpu_custom_call.1} parent=5 // pred_check
        _
      $region10: #{tpu_custom_call.1} parent=5 // pred_check_branch
        %148 = sbr.rel (%p145) target = $region12
      $region11: #{tpu_custom_call.1} parent=5 // pred_region
        %s149 = ssub.s32 %s15, 1
      $region12: #{tpu_custom_call.1} parent=5 // pred_fallthru
        _
      %p150 = scmp.lt.s32.totalorder %s15, 2
      // Predicated region
      $region13: #{tpu_custom_call.1} parent=5 // pred_check
        %p151 = pneg %p150
      $region14: #{tpu_custom_call.1} parent=5 // pred_check_branch
        %153 = sbr.rel (%p151) target = $region16
      $region15: #{tpu_custom_call.1} parent=5 // pred_region
        // Predicated region
        $region17: #{tpu_custom_call.1} parent=15 // pred_check
          %p154 = pneg %p49
        $region18: #{tpu_custom_call.1} parent=15 // pred_check_branch
          %156 = sbr.rel (%p154) target = $region20
        $region19: #{tpu_custom_call.1} parent=15 // pred_region
          %s157 = smul.u32 2, %s23
          %p158 = scmp.lt.s32.totalorder %s22, 1
          %s159 = scalar_select %p158, %s22, 1
          %p160 = scmp.lt.s32.totalorder %s157, 1
          %s161 = scalar_select %p160, %s157, 1
          %s162 = smul.addr %s159, 2
          %s163 = sadd.s32 %s161, %s162
          %s164 = smul.addr %s163, 8
          %s165 = scalar_lea.vmem %s0, %s164
          %s166 = smul.u32 2, %s23
        $region20: #{tpu_custom_call.1} parent=15 // pred_fallthru
          _
        // Predicated region
        $region21: #{tpu_custom_call.1} parent=15 // pred_check
          %p167 = pneg %p75
        $region22: #{tpu_custom_call.1} parent=15 // pred_check_branch
          %169 = sbr.rel (%p167) target = $region24
        $region23: #{tpu_custom_call.1} parent=15 // pred_region
          %s170 = sand.u32 %s65, 1
          %s171 = scalar_lea.sflag [#allocation4], %s170
          %s172 = sand.u32 %s65, 1
          %s173 = smul.addr %s172, 8
          %s174 = scalar_lea.vmem [#allocation3], %s173
          %s176 = ssub.s32 128, 128
          %177 = vsyncadd %s171, %s176
          %s178 = smul.addr %s22, 128
          %s179 = scalar_lea.hbm %s1, %s178
          %s181 = sshll.u32 %s174, 4
          %s182 = int_to_ptr.vmem [resolvable:$true] %s181
          %184 = dma.hbm_to_vmem [thread:$0]  %s179, 128, %s182, %s171
        $region24: #{tpu_custom_call.1} parent=15 // pred_fallthru
          _
        // Predicated region
        $region25: #{tpu_custom_call.1} parent=15 // pred_check
          %p185 = pneg %p103
        $region26: #{tpu_custom_call.1} parent=15 // pred_check_branch
          %187 = sbr.rel (%p185) target = $region28
        $region27: #{tpu_custom_call.1} parent=15 // pred_region
          %s188 = smul.u32 2, %s23
          %p189 = scmp.lt.s32.totalorder %s22, 1
          %s190 = scalar_select %p189, %s22, 1
          %p191 = scmp.lt.s32.totalorder %s188, 1
          %s192 = scalar_select %p191, %s188, 1
          %s193 = smul.addr %s190, 2
          %s194 = sadd.s32 %s192, %s193
          %s195 = smul.addr %s194, 8
          %s196 = scalar_lea.vmem %s2, %s195
          %s197 = smul.u32 2, %s23
        $region28: #{tpu_custom_call.1} parent=15 // pred_fallthru
          _
      $region16: #{tpu_custom_call.1} parent=5 // pred_fallthru
        _
      %p198 = scmp.le.s32.totalorder 1, %s15
      %p199 = scmp.lt.s32.totalorder %s15, 3
      %p200 = pnand %p198, %p199
      %p201 = pneg %p200
      // Predicated region
      $region29: #{tpu_custom_call.1} parent=5 // pred_check
        _
      $region30: #{tpu_custom_call.1} parent=5 // pred_check_branch
        %203 = sbr.rel (%p200) target = $region32
      $region31: #{tpu_custom_call.1} parent=5 // pred_region
        %s204 = ssub.s32 %s15, 1
        %s205 = sand.u32 %s68, 1
        %s206 = scalar_lea.sflag [#allocation4], %s205
        %s207 = sand.u32 %s68, 1
        %s208 = smul.addr %s207, 8
        %s209 = scalar_lea.vmem [#allocation3], %s208
        // Predicated region
        $region33: #{tpu_custom_call.1} parent=31 // pred_check
          %p210 = pneg %p81
        $region34: #{tpu_custom_call.1} parent=31 // pred_check_branch
          %212 = sbr.rel (%p210) target = $region36
        $region35: #{tpu_custom_call.1} parent=31 // pred_region
          %213 = dma.done %s206, 128
        $region36: #{tpu_custom_call.1} parent=31 // pred_fallthru
          _
        %s214 = smul.u32 2, %s25
        %p215 = scmp.lt.s32.totalorder %s24, 1
        %s216 = scalar_select %p215, %s24, 1
        %p217 = scmp.lt.s32.totalorder %s214, 1
        %s218 = scalar_select %p217, %s214, 1
        %s219 = smul.addr %s216, 2
        %s220 = sadd.s32 %s218, %s219
        %s221 = smul.addr %s220, 8
        %s222 = scalar_lea.vmem %s0, %s221
        %p223 = pneg %p55
        %p224 = pneg %p52
        %s225 = sand.u32 %s68, 1
        %s226 = scalar_lea.sflag [#allocation4], %s225
        %s227 = sand.u32 %s68, 1
        %s228 = smul.addr %s227, 8
        %s229 = scalar_lea.vmem [#allocation3], %s228
        %p230 = pneg %p81
        %p231 = pneg %p78
        %s232 = smul.u32 2, %s25
        %p233 = scmp.lt.s32.totalorder %s24, 1
        %s234 = scalar_select %p233, %s24, 1
        %p235 = scmp.lt.s32.totalorder %s232, 1
        %s236 = scalar_select %p235, %s232, 1
        %s237 = smul.addr %s234, 2
        %s238 = sadd.s32 %s236, %s237
        %s239 = smul.addr %s238, 8
        %s240 = scalar_lea.vmem %s2, %s239
        %p241 = pneg %p109
        %p242 = pneg %p106
        %p243 = pneg %p135
        %p244 = pneg %p132
        %s245 = sand.u32 %s122, 1
        %s246 = scalar_lea.sflag [#allocation5], %s245
        %s247 = sand.u32 %s122, 1
        %s248 = smul.addr %s247, 8
        %s249 = scalar_lea.vmem [#allocation6], %s248
        %s250 = smul.u32 2, %s25
        %p251 = scmp.lt.s32.totalorder %s24, 1
        %s252 = scalar_select %p251, %s24, 1
        %p253 = scmp.lt.s32.totalorder %s250, 1
        %s254 = scalar_select %p253, %s250, 1
        %s255 = smul.addr %s252, 2
        %s256 = sadd.s32 %s254, %s255
        %s257 = smul.addr %s256, 8
        %s258 = scalar_lea.vmem %s0, %s257
        %s259 = smul.u32 2, %s25
        %s260 = smul.u32 2, %s25
        %p261 = scmp.lt.s32.totalorder %s24, 1
        %s262 = scalar_select %p261, %s24, 1
        %p263 = scmp.lt.s32.totalorder %s260, 1
        %s264 = scalar_select %p263, %s260, 1
        %s265 = smul.addr %s262, 2
        %s266 = sadd.s32 %s264, %s265
        %s267 = smul.addr %s266, 8
        %s268 = scalar_lea.vmem %s2, %s267
        %s269 = smul.u32 2, %s25
        %p270 = scmp.eq.s32.totalorder %s25, 0
        // Predicated region
        $region37: #{tpu_custom_call.1} parent=31 // pred_check
          %p271 = pneg %p270
        $region38: #{tpu_custom_call.1} parent=31 // pred_check_branch
          %273 = sbr.rel (%p271) target = $region40
        $region39: #{tpu_custom_call.1} parent=31 // pred_region
          %vm274 = vcmask 261120
          %275 = vst.msk [vmem:[#allocation2] sm:$0xff] %vm274, 0.0
        $region40: #{tpu_custom_call.1} parent=31 // pred_fallthru
          _
        %v276 = vld [vmem:[%s258] sm:$0xff]
        %v277 = vld [vmem:[%s258 + $0x8] sm:$0xff]
        %v278 = vld [vmem:[%s209] sm:$0xff]
        %v279 = vld [vmem:[%s268] sm:$0xff]
        %v280 = vld [vmem:[%s268 + $0x8] sm:$0xff]
        %vm281 = vcmask 261120
        %v283 = vsel %vm281, %v276, 0
        %v286 = vsel %vm281, %v277, 0
        %v289 = vsel %vm281, %v278, 0
        %291 = vmatprep.subr.mxu0 0.0
        %292 = vmatpush1.xpose.msra.mxu0 %v289
        %293 = vmatprep.subr.mxu0 0.0
        %294 = vmatpush1.xpose.msra.mxu0 0.0
        %295 = vmatprep.subr.mxu0 0.0
        %296 = vmatpush1.xpose.msra.mxu0 0.0
        %297 = vmatprep.subr.mxu0 0.0
        %298 = vmatpush1.xpose.msra.mxu0 0.0
        %299 = vmatprep.subr.mxu0 0.0
        %300 = vmatpush1.xpose.msra.mxu0 0.0
        %301 = vmatprep.subr.mxu0 0.0
        %302 = vmatpush1.xpose.msra.mxu0 0.0
        %303 = vmatprep.subr.mxu0 0.0
        %304 = vmatpush1.xpose.msra.mxu0 0.0
        %305 = vmatprep.subr.mxu0 0.0
        %306 = vmatpush1.xpose.msra.mxu0 0.0
        %307 = vmatprep.subr.mxu0 0.0
        %308 = vmatpush1.xpose.msra.mxu0 0.0
        %309 = vmatprep.subr.mxu0 0.0
        %310 = vmatpush1.xpose.msra.mxu0 0.0
        %311 = vmatprep.subr.mxu0 0.0
        %312 = vmatpush1.xpose.msra.mxu0 0.0
        %313 = vmatprep.subr.mxu0 0.0
        %314 = vmatpush1.xpose.msra.mxu0 0.0
        %315 = vmatprep.subr.mxu0 0.0
        %316 = vmatpush1.xpose.msra.mxu0 0.0
        %317 = vmatprep.subr.mxu0 0.0
        %318 = vmatpush1.xpose.msra.mxu0 0.0
        %319 = vmatprep.subr.mxu0 0.0
        %320 = vmatpush1.xpose.msra.mxu0 0.0
        %321 = vmatprep.subr.mxu0 0.0
        %322 = vmatpush1.xpose.msra.mxu0 0.0
        %323 = vmatprep.subr.mxu0 0.0
        %324 = vmatpush1.xpose.msra.mxu0 0.0
        %325 = vmatprep.subr.mxu0 0.0
        %326 = vmatpush1.xpose.msra.mxu0 0.0
        %327 = vmatprep.subr.mxu0 0.0
        %328 = vmatpush1.xpose.msra.mxu0 0.0
        %329 = vmatprep.subr.mxu0 0.0
        %330 = vmatpush1.xpose.msra.mxu0 0.0
        %331 = vmatprep.subr.mxu0 0.0
        %332 = vmatpush1.xpose.msra.mxu0 0.0
        %333 = vmatprep.subr.mxu0 0.0
        %334 = vmatpush1.xpose.msra.mxu0 0.0
        %335 = vmatprep.subr.mxu0 0.0
        %336 = vmatpush1.xpose.msra.mxu0 0.0
        %337 = vmatprep.subr.mxu0 0.0
        %338 = vmatpush1.xpose.msra.mxu0 0.0
        %339 = vmatprep.subr.mxu0 0.0
        %340 = vmatpush1.xpose.msra.mxu0 0.0
        %341 = vmatprep.subr.mxu0 0.0
        %342 = vmatpush1.xpose.msra.mxu0 0.0
        %343 = vmatprep.subr.mxu0 0.0
        %344 = vmatpush1.xpose.msra.mxu0 0.0
        %345 = vmatprep.subr.mxu0 0.0
        %346 = vmatpush1.xpose.msra.mxu0 0.0
        %347 = vmatprep.subr.mxu0 0.0
        %348 = vmatpush1.xpose.msra.mxu0 0.0
        %349 = vmatprep.subr.mxu0 0.0
        %350 = vmatpush1.xpose.msra.mxu0 0.0
        %351 = vmatprep.subr.mxu0 0.0
        %352 = vmatpush1.xpose.msra.mxu0 0.0
        %353 = vmatprep.subr.mxu0 0.0
        %354 = vmatpush1.xpose.msra.mxu0 0.0
        %355 = vmatprep.mubr.f32.mxu0 0.0
        %356 = vmatmul.mubr.f32.gmra.mrb[0].mxu0 %v283
        %v357 = vpop.f32.mrb[0].mxu0
        %v358 = vadd.f32 0.0, %v357
        %v359 = vpop.f32.mrb[0].mxu0
        %360 = vmatprep.mubr.f32.mxu0 0.0
        %361 = vmatmul.mubr.f32.gmra.mrb[0].mxu0 %v286
        %v362 = vpop.f32.mrb[0].mxu0
        %v363 = vadd.f32 0.0, %v362
        %v364 = vpop.f32.mrb[0].mxu0
        %365 = vdwg.mxu0
        %367 = vset.pattern.permute.xlu0 0
        %368 = vperm.xlu0 %367, %v279
        %v369 = vpop.permute.xlu0 %368
        %372 = vset.pattern.permute.xlu0 0
        %373 = vperm.xlu0 %372, %v280
        %v374 = vpop.permute.xlu0 %373
        %v376 = vmul.f32 %v358, %v369
        %v377 = vmul.f32 %v363, %v374
        %vm378 = vcmask 64512
        %v379 = vsel %vm378, %v376, -inf
        %v380 = vrot.slane %v379, 4
        %v381 = vmax.f32 %v379, %v380
        %v382 = vrot.slane %v381, 2
        %v383 = vmax.f32 %v381, %v382
        %v384 = vrot.slane %v383, 1
        %v385 = vmax.f32 %v383, %v384
        %v386 = vsel %vm378, %v377, -inf
        %v387 = vrot.slane %v386, 4
        %v388 = vmax.f32 %v386, %v387
        %v389 = vrot.slane %v388, 2
        %v390 = vmax.f32 %v388, %v389
        %v391 = vrot.slane %v390, 1
        %v392 = vmax.f32 %v390, %v391
        %v393 = vsub.f32 %v376, %v385
        %v394 = vsub.f32 %v377, %v392
        %v395 = vmul.f32 %v393, 1.442695
        %v396 = vpow.pop %v395
        %v397 = vmul.f32 %v394, 1.442695
        %v398 = vpow.pop %v397
        %v399 = vsel %vm378, %v396, 0.0
        %v400 = vrot.slane %v399, 4
        %v401 = vadd.f32 %v399, %v400
        %v402 = vrot.slane %v401, 2
        %v403 = vadd.f32 %v401, %v402
        %v404 = vrot.slane %v403, 1
        %v405 = vadd.f32 %v403, %v404
        %v406 = vsel %vm378, %v398, 0.0
        %v407 = vrot.slane %v406, 4
        %v408 = vadd.f32 %v406, %v407
        %v409 = vrot.slane %v408, 2
        %v410 = vadd.f32 %v408, %v409
        %v411 = vrot.slane %v410, 1
        %v412 = vadd.f32 %v410, %v411
        %v413 = vrcp.pop %v405
        %v414 = vrcp.pop %v412
        %v415 = vmul.f32 %v396, %v413
        %v416 = vmul.f32 %v398, %v414
        %v417 = vmul.f32 %v415, %v369
        %v418 = vmul.f32 %v416, %v374
        %v419 = vsel %vm378, %v417, 0.0
        %v420 = vrot.slane %v419, 4
        %v421 = vadd.f32 %v419, %v420
        %v422 = vrot.slane %v421, 2
        %v423 = vadd.f32 %v421, %v422
        %v424 = vrot.slane %v423, 1
        %v425 = vadd.f32 %v423, %v424
        %v426 = vsel %vm378, %v418, 0.0
        %v427 = vrot.slane %v426, 4
        %v428 = vadd.f32 %v426, %v427
        %v429 = vrot.slane %v428, 2
        %v430 = vadd.f32 %v428, %v429
        %v431 = vrot.slane %v430, 1
        %v432 = vadd.f32 %v430, %v431
        %v433 = vadd.f32 %v425, 1e-13
        %v434 = vadd.f32 %v432, 1e-13
        %v435 = vrcp.pop %v433
        %v436 = vrcp.pop %v434
        %v437 = vmul.f32 %v417, %v435
        %v438 = vmul.f32 %v418, %v436
        %v439 = vld [vmem:[#allocation2] sm:$0xff]
        %440 = vxpose.xlu0.b32.start [1/16] %v437, 128
        %441 = vxpose.xlu0.b32.cont [2/16] %v438, 128
        %442 = vxpose.xlu0.b32.cont [3/16] 0.0, 128
        %443 = vxpose.xlu0.b32.cont [4/16] 0.0, 128
        %444 = vxpose.xlu0.b32.cont [5/16] 0.0, 128
        %445 = vxpose.xlu0.b32.cont [6/16] 0.0, 128
        %446 = vxpose.xlu0.b32.cont [7/16] 0.0, 128
        %447 = vxpose.xlu0.b32.cont [8/16] 0.0, 128
        %448 = vxpose.xlu0.b32.cont [9/16] 0.0, 128
        %449 = vxpose.xlu0.b32.cont [10/16] 0.0, 128
        %450 = vxpose.xlu0.b32.cont [11/16] 0.0, 128
        %451 = vxpose.xlu0.b32.cont [12/16] 0.0, 128
        %452 = vxpose.xlu0.b32.cont [13/16] 0.0, 128
        %453 = vxpose.xlu0.b32.cont [14/16] 0.0, 128
        %454 = vxpose.xlu0.b32.cont [15/16] 0.0, 128
        %455 = vxpose.xlu0.b32.end [16/16] 0.0, 128
        %v456 = vpop.trf.xlu0
        %v457 = vpop.trf.xlu0
        %v458 = vpop.trf.xlu0
        %v459 = vpop.trf.xlu0
        %v460 = vpop.trf.xlu0
        %v461 = vpop.trf.xlu0
        %v462 = vpop.trf.xlu0
        %v463 = vpop.trf.xlu0
        %v464 = vpop.trf.xlu0
        %v465 = vpop.trf.xlu0
        %v466 = vpop.trf.xlu0
        %v467 = vpop.trf.xlu0
        %v468 = vpop.trf.xlu0
        %v469 = vpop.trf.xlu0
        %v470 = vpop.trf.xlu0
        %v471 = vpop.trf.xlu0
        %vm472 = vcmask 130048
        %v474 = vsel %vm472, %v456, 0
        %476 = vmatprep.subr.mxu0 0.0
        %477 = vmatpush1.msra.mxu0 %v276
        %478 = vmatprep.subr.mxu0 0.0
        %479 = vmatpush1.msra.mxu0 %v277
        %480 = vmatprep.subr.mxu0 0.0
        %481 = vmatpush1.msra.mxu0 0.0
        %482 = vmatprep.subr.mxu0 0.0
        %483 = vmatpush1.msra.mxu0 0.0
        %484 = vmatprep.subr.mxu0 0.0
        %485 = vmatpush1.msra.mxu0 0.0
        %486 = vmatprep.subr.mxu0 0.0
        %487 = vmatpush1.msra.mxu0 0.0
        %488 = vmatprep.subr.mxu0 0.0
        %489 = vmatpush1.msra.mxu0 0.0
        %490 = vmatprep.subr.mxu0 0.0
        %491 = vmatpush1.msra.mxu0 0.0
        %492 = vmatprep.subr.mxu0 0.0
        %493 = vmatpush1.msra.mxu0 0.0
        %494 = vmatprep.subr.mxu0 0.0
        %495 = vmatpush1.msra.mxu0 0.0
        %496 = vmatprep.subr.mxu0 0.0
        %497 = vmatpush1.msra.mxu0 0.0
        %498 = vmatprep.subr.mxu0 0.0
        %499 = vmatpush1.msra.mxu0 0.0
        %500 = vmatprep.subr.mxu0 0.0
        %501 = vmatpush1.msra.mxu0 0.0
        %502 = vmatprep.subr.mxu0 0.0
        %503 = vmatpush1.msra.mxu0 0.0
        %504 = vmatprep.subr.mxu0 0.0
        %505 = vmatpush1.msra.mxu0 0.0
        %506 = vmatprep.subr.mxu0 0.0
        %507 = vmatpush1.msra.mxu0 0.0
        %508 = vmatprep.subr.mxu0 0.0
        %509 = vmatpush1.msra.mxu0 0.0
        %510 = vmatprep.subr.mxu0 0.0
        %511 = vmatpush1.msra.mxu0 0.0
        %512 = vmatprep.subr.mxu0 0.0
        %513 = vmatpush1.msra.mxu0 0.0
        %514 = vmatprep.subr.mxu0 0.0
        %515 = vmatpush1.msra.mxu0 0.0
        %516 = vmatprep.subr.mxu0 0.0
        %517 = vmatpush1.msra.mxu0 0.0
        %518 = vmatprep.subr.mxu0 0.0
        %519 = vmatpush1.msra.mxu0 0.0
        %520 = vmatprep.subr.mxu0 0.0
        %521 = vmatpush1.msra.mxu0 0.0
        %522 = vmatprep.subr.mxu0 0.0
        %523 = vmatpush1.msra.mxu0 0.0
        %524 = vmatprep.subr.mxu0 0.0
        %525 = vmatpush1.msra.mxu0 0.0
        %526 = vmatprep.subr.mxu0 0.0
        %527 = vmatpush1.msra.mxu0 0.0
        %528 = vmatprep.subr.mxu0 0.0
        %529 = vmatpush1.msra.mxu0 0.0
        %530 = vmatprep.subr.mxu0 0.0
        %531 = vmatpush1.msra.mxu0 0.0
        %532 = vmatprep.subr.mxu0 0.0
        %533 = vmatpush1.msra.mxu0 0.0
        %534 = vmatprep.subr.mxu0 0.0
        %535 = vmatpush1.msra.mxu0 0.0
        %536 = vmatprep.subr.mxu0 0.0
        %537 = vmatpush1.msra.mxu0 0.0
        %538 = vmatprep.subr.mxu0 0.0
        %539 = vmatpush1.msra.mxu0 0.0
        %540 = vmatprep.mubr.f32.mxu0 0.0
        %541 = vmatmul.mubr.f32.gmra.mrb[0].mxu0 %v474
        %v542 = vpop.f32.mrb[0].mxu0
        %v543 = vadd.f32 0.0, %v542
        %v544 = vpop.f32.mrb[0].mxu0
        %545 = vdwg.mxu0
        %v546 = vadd.f32 %v439, %v543
        %547 = vst.msk [vmem:[#allocation2] sm:$0xff] %vm281, %v546
        // Predicated region
        $region41: #{tpu_custom_call.1} parent=31 // pred_check
          %p548 = pneg %p270
        $region42: #{tpu_custom_call.1} parent=31 // pred_check_branch
          %550 = sbr.rel (%p548) target = $region44
        $region43: #{tpu_custom_call.1} parent=31 // pred_region
          %v551 = vld [vmem:[#allocation2] sm:$0xff]
          %552 = vst.msk [vmem:[%s249] sm:$0xff] %vm281, %v551
        $region44: #{tpu_custom_call.1} parent=31 // pred_fallthru
          _
        %s553 = sand.u32 %s122, 1
        %s554 = scalar_lea.sflag [#allocation5], %s553
        %s555 = sand.u32 %s122, 1
        %s556 = smul.addr %s555, 8
        %s557 = scalar_lea.vmem [#allocation6], %s556
        // Predicated region
        $region45: #{tpu_custom_call.1} parent=31 // pred_check
          %p558 = pneg %p132
        $region46: #{tpu_custom_call.1} parent=31 // pred_check_branch
          %560 = sbr.rel (%p558) target = $region48
        $region47: #{tpu_custom_call.1} parent=31 // pred_region
          %s562 = ssub.s32 128, 128
          %563 = vsyncadd %s554, %s562
          %s564 = smul.addr %s24, 128
          %s565 = scalar_lea.hbm %s3, %s564
          %s567 = sshll.u32 %s557, 4
          %s568 = int_to_ptr.vmem [resolvable:$true] %s567
          %570 = dma.vmem_to_hbm [thread:$0]  %s568, 128, %s565, %s554
        $region48: #{tpu_custom_call.1} parent=31 // pred_fallthru
          _
      $region32: #{tpu_custom_call.1} parent=5 // pred_fallthru
        _
      %p571 = scmp.le.s32.totalorder 2, %s15
      // Predicated region
      $region49: #{tpu_custom_call.1} parent=5 // pred_check
        %p572 = pneg %p571
      $region50: #{tpu_custom_call.1} parent=5 // pred_check_branch
        %574 = sbr.rel (%p572) target = $region52
      $region51: #{tpu_custom_call.1} parent=5 // pred_region
        %s575 = ssub.s32 %s15, 2
        // Predicated region
        $region53: #{tpu_custom_call.1} parent=51 // pred_check
          %p576 = pneg %p138
        $region54: #{tpu_custom_call.1} parent=51 // pred_check_branch
          %578 = sbr.rel (%p576) target = $region56
        $region55: #{tpu_custom_call.1} parent=51 // pred_region
          %s579 = sand.u32 %s123, 1
          %s580 = scalar_lea.sflag [#allocation5], %s579
          %s581 = sand.u32 %s123, 1
          %s582 = smul.addr %s581, 8
          %s583 = scalar_lea.vmem [#allocation6], %s582
          %584 = dma.done %s580, 128
        $region56: #{tpu_custom_call.1} parent=51 // pred_fallthru
          _
      $region52: #{tpu_custom_call.1} parent=5 // pred_fallthru
        _
    $region6: #{tpu_custom_call.1} parent=1 // loop_footer
      %s19 = sadd.s32 1, %s15
    $region7: #{tpu_custom_call.1} parent=1 // loop_footer_branch
      %14 = sbr.rel target = $region3
    $region8: #{tpu_custom_call.1} parent=1 // loop_exit
      _
    %585 = vsyncpa [#allocation4], 1
    %s586 = scalar_lea.sflag [#allocation4], 1
    %587 = vsyncpa %s586, 1
    %588 = vsyncpa [#allocation5], 1
    %s589 = scalar_lea.sflag [#allocation5], 1
    %590 = vsyncpa %s589, 1

</llo_original>
